<compile_context>
chip_gen: v7x
topology: tpu7x:2x2x1
jax: 0.10.0
libtpu: 0.0.40
codegen_flags: <defaults>
</compile_context>

<pallas_src>
import jax
import jax.numpy as jnp
from jax.experimental import pallas as pl
from jax.experimental.pallas import tpu as pltpu


def _round_up(x, m):
    return (x + m - 1) // m * m


def _stable_sigmoid(x):
    # exp of a non-positive argument -> never overflows; exp issues to the EUP.
    z = jnp.exp(-jnp.abs(x))
    return jnp.where(x >= 0, 1.0, z) / (1.0 + z)


def _prepare_params(w_i2h, b_i2h, w_h2o, b_h2o, data_size):
    """One-time weight preprocessing (hoisted out of the recurrent hot path)."""
    w_i2h = w_i2h.astype(jnp.float32)
    w_h2o = w_h2o.astype(jnp.float32)
    bi = b_i2h.reshape(1, -1).astype(jnp.float32)   # (1, H)
    bo = b_h2o.reshape(1, -1).astype(jnp.float32)   # (1, O)
    wd = w_i2h[:data_size, :]                       # (D, H) rows acting on data
    wh = w_i2h[data_size:, :]                       # (H, H) rows acting on h_prev
    # Fold h2o into i2h:  o = h @ W_h2o + b_h2o
    #                       = s @ (W_i2h @ W_h2o) + (b_i2h @ W_h2o + b_h2o)
    wfd = wd @ w_h2o                                # (D, O)
    wfh = wh @ w_h2o                                # (H, O)
    bf = bi @ w_h2o + bo                            # (1, O)
    return wd, wh, bi, wfd, wfh, bf


# ---------------------------------------------------------------------------
# Single-step kernel (exact semantics of RNN.forward(data_, last_hidden)).
# ---------------------------------------------------------------------------
def rnn_step_kernel(d_ref, hprev_ref, wd_ref, wh_ref, bi_ref,
                    wfd_ref, wfh_ref, bf_ref, h_ref, o_ref):
    sd = _stable_sigmoid(d_ref[...])      # (B, D)
    sh = _stable_sigmoid(hprev_ref[...])  # (B, H)
    h = (jnp.dot(sd, wd_ref[...], preferred_element_type=jnp.float32)
         + jnp.dot(sh, wh_ref[...], preferred_element_type=jnp.float32)
         + bi_ref[...])
    # Output path is independent of h (W_h2o pre-folded) -> no serial MXU chain.
    o = (jnp.dot(sd, wfd_ref[...], preferred_element_type=jnp.float32)
         + jnp.dot(sh, wfh_ref[...], preferred_element_type=jnp.float32)
         + bf_ref[...])
    h_ref[...] = h.astype(h_ref.dtype)
    o_ref[...] = o.astype(o_ref.dtype)


def rnn_forward(data_, last_hidden, w_i2h, b_i2h, w_h2o, b_h2o):
    """One RNN step: returns (hidden_, output_), matching the PyTorch module."""
    B, D = data_.shape
    H = w_i2h.shape[1]
    O = w_h2o.shape[1]
    wd, wh, bi, wfd, wfh, bf = _prepare_params(w_i2h, b_i2h, w_h2o, b_h2o, D)

    # Fill sublanes: pad batch to a multiple of 8.
    Bp = max(8, _round_up(B, 8))
    d = jnp.pad(data_.astype(jnp.float32), ((0, Bp - B), (0, 0)))
    hprev = jnp.pad(last_hidden.astype(jnp.float32), ((0, Bp - B), (0, 0)))

    vmem = pl.BlockSpec(memory_space=pltpu.MemorySpace.VMEM)
    hidden_, output_ = pl.pallas_call(
        rnn_step_kernel,
        out_shape=(
            jax.ShapeDtypeStruct((Bp, H), jnp.float32),
            jax.ShapeDtypeStruct((Bp, O), jnp.float32),
        ),
        in_specs=[vmem] * 8,
        out_specs=(vmem, vmem),
    )(d, hprev, wd, wh, bi, wfd, wfh, bf)
    return hidden_[:B], output_[:B]


# ---------------------------------------------------------------------------
# Fused-sequence kernel: T RNN steps in ONE pallas_call.
# Grid iterates over time ("arbitrary"); weights stay resident in VMEM
# (constant index_maps -> no re-DMA); hidden state lives in a VMEM scratch.
# ---------------------------------------------------------------------------
def rnn_seq_kernel(d_ref, h0_ref, wd_ref, wh_ref, bi_ref,
                   wfd_ref, wfh_ref, bf_ref, h_out_ref, o_out_ref, h_state):
    @pl.when(pl.program_id(0) == 0)
    def _():
        h_state[...] = h0_ref[...]

    sd = _stable_sigmoid(d_ref[...])      # (B, D) for this timestep
    sh = _stable_sigmoid(h_state[...])    # (B, H) carried hidden state
    h_new = (jnp.dot(sd, wd_ref[...], preferred_element_type=jnp.float32)
             + jnp.dot(sh, wh_ref[...], preferred_element_type=jnp.float32)
             + bi_ref[...])
    o = (jnp.dot(sd, wfd_ref[...], preferred_element_type=jnp.float32)
         + jnp.dot(sh, wfh_ref[...], preferred_element_type=jnp.float32)
         + bf_ref[...])
    h_state[...] = h_new
    h_out_ref[...] = h_new.astype(h_out_ref.dtype)
    o_out_ref[...] = o.astype(o_out_ref.dtype)


def rnn_forward_sequence(data_seq, h0, w_i2h, b_i2h, w_h2o, b_h2o):
    """Apply the RNN over a whole sequence (T, B, D) with one kernel launch.
    Returns (hidden_seq, output_seq) of shapes (T, B, H) and (T, B, O)."""
    T, B, D = data_seq.shape
    H = w_i2h.shape[1]
    O = w_h2o.shape[1]
    wd, wh, bi, wfd, wfh, bf = _prepare_params(w_i2h, b_i2h, w_h2o, b_h2o, D)

    Bp = max(8, _round_up(B, 8))
    d_seq = jnp.pad(data_seq.astype(jnp.float32), ((0, 0), (0, Bp - B), (0, 0)))
    h0p = jnp.pad(h0.astype(jnp.float32), ((0, Bp - B), (0, 0)))

    const2 = lambda t: (0, 0)   # weights/biases: same block every step -> resident
    hidden_seq, output_seq = pl.pallas_call(
        rnn_seq_kernel,
        out_shape=(
            jax.ShapeDtypeStruct((T, Bp, H), jnp.float32),
            jax.ShapeDtypeStruct((T, Bp, O), jnp.float32),
        ),
        grid=(T,),
        in_specs=[
            pl.BlockSpec((None, Bp, D), lambda t: (t, 0, 0)),  # data at step t
            pl.BlockSpec((Bp, H), const2),                     # h0
            pl.BlockSpec((D, H), const2),                      # wd
            pl.BlockSpec((H, H), const2),                      # wh
            pl.BlockSpec((1, H), const2),                      # bi
            pl.BlockSpec((D, O), const2),                      # wfd
            pl.BlockSpec((H, O), const2),                      # wfh
            pl.BlockSpec((1, O), const2),                      # bf
        ],
        out_specs=(
            pl.BlockSpec((None, Bp, H), lambda t: (t, 0, 0)),
            pl.BlockSpec((None, Bp, O), lambda t: (t, 0, 0)),
        ),
        scratch_shapes=[pltpu.VMEM((Bp, H), jnp.float32)],     # carried hidden
        compiler_params=pltpu.CompilerParams(
            dimension_semantics=("arbitrary",)),
    )(d_seq, h0p, wd, wh, bi, wfd, wfh, bf)
    return hidden_seq[:, :B, :], output_seq[:, :B, :]


if __name__ == "__main__":
    B, DATA, HIDDEN, OUTPUT, T = 2, 16, 32, 8, 8
    INPUT = DATA + HIDDEN

    key = jax.random.PRNGKey(0)
    k0, k1, k2, k3, k4, k5, k6 = jax.random.split(key, 7)

    # Deterministic init (mimics nn.Linear's U(-1/sqrt(fan_in), 1/sqrt(fan_in))).
    bound_i2h = 1.0 / (INPUT ** 0.5)
    bound_h2o = 1.0 / (HIDDEN ** 0.5)
    w_i2h = jax.random.uniform(k0, (INPUT, HIDDEN), jnp.float32, -bound_i2h, bound_i2h)
    b_i2h = jax.random.uniform(k1, (HIDDEN,), jnp.float32, -bound_i2h, bound_i2h)
    w_h2o = jax.random.uniform(k2, (HIDDEN, OUTPUT), jnp.float32, -bound_h2o, bound_h2o)
    b_h2o = jax.random.uniform(k3, (OUTPUT,), jnp.float32, -bound_h2o, bound_h2o)

    data_ = jax.random.normal(k4, (B, DATA), jnp.float32)
    last_hidden = jax.random.normal(k5, (B, HIDDEN), jnp.float32)
    data_seq = jax.random.normal(k6, (T, B, DATA), jnp.float32)

    # ---- single step (exact module.forward semantics) ----
    hidden_, output_ = rnn_forward(data_, last_hidden, w_i2h, b_i2h, w_h2o, b_h2o)
    jax.block_until_ready((hidden_, output_))

    x = jnp.concatenate([data_, last_hidden], axis=1)
    s = jax.nn.sigmoid(x)
    h_ref = s @ w_i2h + b_i2h
    o_ref = h_ref @ w_h2o + b_h2o
    assert hidden_.shape == (B, HIDDEN) and output_.shape == (B, OUTPUT)
    assert jnp.allclose(hidden_, h_ref, atol=1e-4, rtol=1e-4)
    assert jnp.allclose(output_, o_ref, atol=1e-4, rtol=1e-4)

    # ---- fused recurrent sequence: T steps in one pallas_call ----
    hid_seq, out_seq = rnn_forward_sequence(
        data_seq, last_hidden, w_i2h, b_i2h, w_h2o, b_h2o)
    jax.block_until_ready((hid_seq, out_seq))

    def ref_step(h, d):
        xx = jnp.concatenate([d, h], axis=1)
        ss = jax.nn.sigmoid(xx)
        hn = ss @ w_i2h + b_i2h
        oo = hn @ w_h2o + b_h2o
        return hn, (hn, oo)

    _, (h_seq_ref, o_seq_ref) = jax.lax.scan(ref_step, last_hidden, data_seq)
    assert hid_seq.shape == (T, B, HIDDEN) and out_seq.shape == (T, B, OUTPUT)
    assert jnp.allclose(hid_seq, h_seq_ref, atol=1e-4, rtol=1e-4)
    assert jnp.allclose(out_seq, o_seq_ref, atol=1e-4, rtol=1e-4)

    print("KERNEL_OK")
</pallas_src>

<mosaic_0001>
module attributes {stable_mosaic.version = 11 : i64} {
  func.func @rnn_step_kernel(%arg0: memref<8x16xf32, #tpu.memory_space<vmem>>, %arg1: memref<8x32xf32, #tpu.memory_space<vmem>>, %arg2: memref<16x32xf32, #tpu.memory_space<vmem>>, %arg3: memref<32x32xf32, #tpu.memory_space<vmem>>, %arg4: memref<1x32xf32, #tpu.memory_space<vmem>>, %arg5: memref<16x8xf32, #tpu.memory_space<vmem>>, %arg6: memref<32x8xf32, #tpu.memory_space<vmem>>, %arg7: memref<1x8xf32, #tpu.memory_space<vmem>>, %arg8: memref<8x32xf32, #tpu.memory_space<vmem>>, %arg9: memref<8x8xf32, #tpu.memory_space<vmem>>) attributes {dimension_semantics = [], scalar_prefetch = 0 : i64, scratch_operands = 0 : i64, tpu.core_type = #tpu.core_type<tc>} {
    %c0 = arith.constant 0 : index
    %c0_0 = arith.constant 0 : index
    %0 = vector.load %arg0[%c0, %c0_0] : memref<8x16xf32, #tpu.memory_space<vmem>>, vector<8x16xf32>
    %1 = math.absf %0 : vector<8x16xf32>
    %cst = arith.constant 0.000000e+00 : f32
    %2 = vector.broadcast %cst : f32 to vector<8x16xf32>
    %3 = arith.subf %2, %1 : vector<8x16xf32>
    %4 = math.exp %3 : vector<8x16xf32>
    %cst_1 = arith.constant 0.000000e+00 : f32
    %5 = vector.broadcast %cst_1 : f32 to vector<8x16xf32>
    %6 = arith.cmpf oge, %0, %5 : vector<8x16xf32>
    %cst_2 = arith.constant 1.000000e+00 : f32
    %7 = vector.broadcast %cst_2 : f32 to vector<8x16xf32>
    %8 = arith.select %6, %7, %4 : vector<8x16xi1>, vector<8x16xf32>
    %cst_3 = arith.constant 1.000000e+00 : f32
    %9 = vector.broadcast %cst_3 : f32 to vector<8x16xf32>
    %10 = arith.addf %9, %4 : vector<8x16xf32>
    %11 = arith.divf %8, %10 : vector<8x16xf32>
    %c0_4 = arith.constant 0 : index
    %c0_5 = arith.constant 0 : index
    %12 = vector.load %arg1[%c0_4, %c0_5] : memref<8x32xf32, #tpu.memory_space<vmem>>, vector<8x32xf32>
    %13 = math.absf %12 : vector<8x32xf32>
    %cst_6 = arith.constant 0.000000e+00 : f32
    %14 = vector.broadcast %cst_6 : f32 to vector<8x32xf32>
    %15 = arith.subf %14, %13 : vector<8x32xf32>
    %16 = math.exp %15 : vector<8x32xf32>
    %cst_7 = arith.constant 0.000000e+00 : f32
    %17 = vector.broadcast %cst_7 : f32 to vector<8x32xf32>
    %18 = arith.cmpf oge, %12, %17 : vector<8x32xf32>
    %cst_8 = arith.constant 1.000000e+00 : f32
    %19 = vector.broadcast %cst_8 : f32 to vector<8x32xf32>
    %20 = arith.select %18, %19, %16 : vector<8x32xi1>, vector<8x32xf32>
    %cst_9 = arith.constant 1.000000e+00 : f32
    %21 = vector.broadcast %cst_9 : f32 to vector<8x32xf32>
    %22 = arith.addf %21, %16 : vector<8x32xf32>
    %23 = arith.divf %20, %22 : vector<8x32xf32>
    %c0_10 = arith.constant 0 : index
    %c0_11 = arith.constant 0 : index
    %24 = vector.load %arg2[%c0_10, %c0_11] : memref<16x32xf32, #tpu.memory_space<vmem>>, vector<16x32xf32>
    %cst_12 = arith.constant dense<0.000000e+00> : vector<8x32xf32>
    %25 = tpu.matmul %11, %24, %cst_12 {dimension_numbers = #tpu.dot_dimension_numbers<[1], [0], [0], [1], [0, 0, 1, 1], [], []>} : vector<8x16xf32>, vector<16x32xf32>, vector<8x32xf32> -> vector<8x32xf32>
    %c0_13 = arith.constant 0 : index
    %c0_14 = arith.constant 0 : index
    %26 = vector.load %arg3[%c0_13, %c0_14] : memref<32x32xf32, #tpu.memory_space<vmem>>, vector<32x32xf32>
    %cst_15 = arith.constant dense<0.000000e+00> : vector<8x32xf32>
    %27 = tpu.matmul %23, %26, %cst_15 {dimension_numbers = #tpu.dot_dimension_numbers<[1], [0], [0], [1], [0, 0, 1, 1], [], []>} : vector<8x32xf32>, vector<32x32xf32>, vector<8x32xf32> -> vector<8x32xf32>
    %28 = arith.addf %25, %27 : vector<8x32xf32>
    %c0_16 = arith.constant 0 : index
    %c0_17 = arith.constant 0 : index
    %29 = vector.load %arg4[%c0_16, %c0_17] : memref<1x32xf32, #tpu.memory_space<vmem>>, vector<1x32xf32>
    %30 = vector.broadcast %29 : vector<1x32xf32> to vector<8x32xf32>
    %31 = arith.addf %28, %30 : vector<8x32xf32>
    %c0_18 = arith.constant 0 : index
    %c0_19 = arith.constant 0 : index
    %32 = vector.load %arg5[%c0_18, %c0_19] : memref<16x8xf32, #tpu.memory_space<vmem>>, vector<16x8xf32>
    %cst_20 = arith.constant dense<0.000000e+00> : vector<8x8xf32>
    %33 = tpu.matmul %11, %32, %cst_20 {dimension_numbers = #tpu.dot_dimension_numbers<[1], [0], [0], [1], [0, 0, 1, 1], [], []>} : vector<8x16xf32>, vector<16x8xf32>, vector<8x8xf32> -> vector<8x8xf32>
    %c0_21 = arith.constant 0 : index
    %c0_22 = arith.constant 0 : index
    %34 = vector.load %arg6[%c0_21, %c0_22] : memref<32x8xf32, #tpu.memory_space<vmem>>, vector<32x8xf32>
    %cst_23 = arith.constant dense<0.000000e+00> : vector<8x8xf32>
    %35 = tpu.matmul %23, %34, %cst_23 {dimension_numbers = #tpu.dot_dimension_numbers<[1], [0], [0], [1], [0, 0, 1, 1], [], []>} : vector<8x32xf32>, vector<32x8xf32>, vector<8x8xf32> -> vector<8x8xf32>
    %36 = arith.addf %33, %35 : vector<8x8xf32>
    %c0_24 = arith.constant 0 : index
    %c0_25 = arith.constant 0 : index
    %37 = vector.load %arg7[%c0_24, %c0_25] : memref<1x8xf32, #tpu.memory_space<vmem>>, vector<1x8xf32>
    %38 = vector.broadcast %37 : vector<1x8xf32> to vector<8x8xf32>
    %39 = arith.addf %36, %38 : vector<8x8xf32>
    %c0_26 = arith.constant 0 : index
    %c0_27 = arith.constant 0 : index
    %40 = vector.load %arg8[%c0_26, %c0_27] : memref<8x32xf32, #tpu.memory_space<vmem>>, vector<8x32xf32>
    tpu.vector_store %arg8[%c0_26, %c0_27], %31 {strides = array<i32>} : memref<8x32xf32, #tpu.memory_space<vmem>>, vector<8x32xf32>,
    %c0_28 = arith.constant 0 : index
    %c0_29 = arith.constant 0 : index
    %41 = vector.load %arg9[%c0_28, %c0_29] : memref<8x8xf32, #tpu.memory_space<vmem>>, vector<8x8xf32>
    tpu.vector_store %arg9[%c0_28, %c0_29], %39 {strides = array<i32>} : memref<8x8xf32, #tpu.memory_space<vmem>>, vector<8x8xf32>,
    return
  }
}

</mosaic_0001>

<llo_original>
// kernel: tpu_custom_call.1
$region0: #{tpu_custom_call.1}
  #allocation0 [shape = 'u32[]', space=smem, size = 0x4, offset = 0x4, fixed_abs, tag = 'smem constant byte address 0x4 - core index']
  #allocation1 [shape = 'u32[144,128]{1,0:T(1,128)}', space=vmem, size = 0x12000, scoped, tag = 'internal scratch']
  %s0 = inlined_call_operand.vmem [shape: f32[8,16], index: 0, kind: input, shape index: {}]
  %s1 = inlined_call_operand.vmem [shape: f32[8,32], index: 1, kind: input, shape index: {}]
  %s2 = inlined_call_operand.vmem [shape: f32[16,32], index: 2, kind: input, shape index: {}]
  %s3 = inlined_call_operand.vmem [shape: f32[32,32], index: 3, kind: input, shape index: {}]
  %s4 = inlined_call_operand.vmem [shape: f32[1,32], index: 4, kind: input, shape index: {}]
  %s5 = inlined_call_operand.vmem [shape: f32[16,8], index: 5, kind: input, shape index: {}]
  %s6 = inlined_call_operand.vmem [shape: f32[32,8], index: 6, kind: input, shape index: {}]
  %s7 = inlined_call_operand.vmem [shape: f32[1,8], index: 7, kind: input, shape index: {}]
  %s8 = inlined_call_operand.hbm [shape: f32[8,32], index: 8, kind: output, shape index: {0}]
  %s9 = inlined_call_operand.hbm [shape: f32[8,8], index: 9, kind: output, shape index: {1}]
  %10 = xla_tuple %s8, %s9
  %s11 = sld [smem:[#allocation0]]
  $region50: #{tpu_custom_call.1} parent=0
    _
  %s13 = ssub.s32 1, %s11
  %s14 = scalar_select 0, %s13, %s11
  $region1: #{tpu_custom_call.1} parent=0
    #allocation2 [shape = 'u8[4096]{0}', space=vmem, size = 0x1000, scoped, tag = 'output window, operand 0, single buffered']
    #allocation3 [shape = 's32[1]{0}', space=sflag, size = 0x4, scoped, tag = 'scoped memory for tpu_custom_call.1']
    #allocation4 [shape = 'u8[4096]{0}', space=vmem, size = 0x1000, scoped, tag = 'output window, operand 1, single buffered']
    #allocation5 [shape = 's32[1]{0}', space=sflag, size = 0x4, scoped, tag = 'scoped memory for tpu_custom_call.1']
    %15 = vsyncpa [#allocation3], 0
    %16 = vsyncpa [#allocation5], 0
    // Predicated region
    $region2: #{tpu_custom_call.1} parent=1 // pred_check
      _
    $region3: #{tpu_custom_call.1} parent=1 // pred_check_branch
      %18 = sbr.rel (0) target = $region5
    $region4: #{tpu_custom_call.1} parent=1 // pred_region
      _
    $region5: #{tpu_custom_call.1} parent=1 // pred_fallthru
      _
    // Predicated region
    $region6: #{tpu_custom_call.1} parent=1 // pred_check
      _
    $region7: #{tpu_custom_call.1} parent=1 // pred_check_branch
      %20 = sbr.rel (0) target = $region9
    $region8: #{tpu_custom_call.1} parent=1 // pred_region
      _
    $region9: #{tpu_custom_call.1} parent=1 // pred_fallthru
      _
    // Predicated region
    $region10: #{tpu_custom_call.1} parent=1 // pred_check
      _
    $region11: #{tpu_custom_call.1} parent=1 // pred_check_branch
      %22 = sbr.rel (0) target = $region13
    $region12: #{tpu_custom_call.1} parent=1 // pred_region
      _
    $region13: #{tpu_custom_call.1} parent=1 // pred_fallthru
      _
    // Predicated region
    $region14: #{tpu_custom_call.1} parent=1 // pred_check
      _
    $region15: #{tpu_custom_call.1} parent=1 // pred_check_branch
      %24 = sbr.rel (0) target = $region17
    $region16: #{tpu_custom_call.1} parent=1 // pred_region
      _
    $region17: #{tpu_custom_call.1} parent=1 // pred_fallthru
      _
    // Predicated region
    $region18: #{tpu_custom_call.1} parent=1 // pred_check
      _
    $region19: #{tpu_custom_call.1} parent=1 // pred_check_branch
      %26 = sbr.rel (0) target = $region21
    $region20: #{tpu_custom_call.1} parent=1 // pred_region
      _
    $region21: #{tpu_custom_call.1} parent=1 // pred_fallthru
      _
    // Predicated region
    $region22: #{tpu_custom_call.1} parent=1 // pred_check
      _
    $region23: #{tpu_custom_call.1} parent=1 // pred_check_branch
      %28 = sbr.rel (0) target = $region25
    $region24: #{tpu_custom_call.1} parent=1 // pred_region
      _
    $region25: #{tpu_custom_call.1} parent=1 // pred_fallthru
      _
    // Predicated region
    $region26: #{tpu_custom_call.1} parent=1 // pred_check
      _
    $region27: #{tpu_custom_call.1} parent=1 // pred_check_branch
      %30 = sbr.rel (0) target = $region29
    $region28: #{tpu_custom_call.1} parent=1 // pred_region
      _
    $region29: #{tpu_custom_call.1} parent=1 // pred_fallthru
      _
    // Predicated region
    $region30: #{tpu_custom_call.1} parent=1 // pred_check
      _
    $region31: #{tpu_custom_call.1} parent=1 // pred_check_branch
      %32 = sbr.rel (0) target = $region33
    $region32: #{tpu_custom_call.1} parent=1 // pred_region
      _
    $region33: #{tpu_custom_call.1} parent=1 // pred_fallthru
      _
    %v33 = vld [vmem:[%s0] sm:$0xff]
    %v34 = vand.u32 2147483647, %v33
    %v35 = vsub.f32 0.0, %v34
    %v36 = vmul.f32 %v35, 1.442695
    %v37 = vpow.pop %v36
    %vm38 = vcmp.ge.f32.partialorder %v33, 0.0
    %v39 = vsel %vm38, 1.0, %v37
    %v40 = vadd.f32 %v37, 1.0
    %v41 = vrcp.pop %v40
    %v42 = vmul.f32 %v39, %v41
    %v43 = vld [vmem:[%s1] sm:$0xff]
    %v44 = vand.u32 2147483647, %v43
    %v45 = vsub.f32 0.0, %v44
    %v46 = vmul.f32 %v45, 1.442695
    %v47 = vpow.pop %v46
    %vm48 = vcmp.ge.f32.partialorder %v43, 0.0
    %v49 = vsel %vm48, 1.0, %v47
    %v50 = vadd.f32 %v47, 1.0
    %v51 = vrcp.pop %v50
    %v52 = vmul.f32 %v49, %v51
    %v53 = vld [vmem:[%s2] sm:$0xff]
    %v54 = vld [vmem:[%s2 + $0x8] sm:$0xff]
    %v55 = vld [vmem:[%s3] sm:$0xff]
    %v56 = vld [vmem:[%s3 + $0x8] sm:$0xff]
    %v57 = vld [vmem:[%s3 + $0x10] sm:$0xff]
    %v58 = vld [vmem:[%s3 + $0x18] sm:$0xff]
    %vm59 = vcmask 261120
    %v61 = vsel %vm59, %v52, 0
    %63 = vmatprep.subr.mxu0 0.0
    %64 = vmatpush1.msra.mxu0 %v55
    %65 = vmatprep.subr.mxu0 0.0
    %66 = vmatpush1.msra.mxu0 %v56
    %67 = vmatprep.subr.mxu0 0.0
    %68 = vmatpush1.msra.mxu0 %v57
    %69 = vmatprep.subr.mxu0 0.0
    %70 = vmatpush1.msra.mxu0 %v58
    %71 = vmatprep.subr.mxu0 0.0
    %72 = vmatpush1.msra.mxu0 0.0
    %73 = vmatprep.subr.mxu0 0.0
    %74 = vmatpush1.msra.mxu0 0.0
    %75 = vmatprep.subr.mxu0 0.0
    %76 = vmatpush1.msra.mxu0 0.0
    %77 = vmatprep.subr.mxu0 0.0
    %78 = vmatpush1.msra.mxu0 0.0
    %79 = vmatprep.subr.mxu0 0.0
    %80 = vmatpush1.msra.mxu0 0.0
    %81 = vmatprep.subr.mxu0 0.0
    %82 = vmatpush1.msra.mxu0 0.0
    %83 = vmatprep.subr.mxu0 0.0
    %84 = vmatpush1.msra.mxu0 0.0
    %85 = vmatprep.subr.mxu0 0.0
    %86 = vmatpush1.msra.mxu0 0.0
    %87 = vmatprep.subr.mxu0 0.0
    %88 = vmatpush1.msra.mxu0 0.0
    %89 = vmatprep.subr.mxu0 0.0
    %90 = vmatpush1.msra.mxu0 0.0
    %91 = vmatprep.subr.mxu0 0.0
    %92 = vmatpush1.msra.mxu0 0.0
    %93 = vmatprep.subr.mxu0 0.0
    %94 = vmatpush1.msra.mxu0 0.0
    %95 = vmatprep.subr.mxu0 0.0
    %96 = vmatpush1.msra.mxu0 0.0
    %97 = vmatprep.subr.mxu0 0.0
    %98 = vmatpush1.msra.mxu0 0.0
    %99 = vmatprep.subr.mxu0 0.0
    %100 = vmatpush1.msra.mxu0 0.0
    %101 = vmatprep.subr.mxu0 0.0
    %102 = vmatpush1.msra.mxu0 0.0
    %103 = vmatprep.subr.mxu0 0.0
    %104 = vmatpush1.msra.mxu0 0.0
    %105 = vmatprep.subr.mxu0 0.0
    %106 = vmatpush1.msra.mxu0 0.0
    %107 = vmatprep.subr.mxu0 0.0
    %108 = vmatpush1.msra.mxu0 0.0
    %109 = vmatprep.subr.mxu0 0.0
    %110 = vmatpush1.msra.mxu0 0.0
    %111 = vmatprep.subr.mxu0 0.0
    %112 = vmatpush1.msra.mxu0 0.0
    %113 = vmatprep.subr.mxu0 0.0
    %114 = vmatpush1.msra.mxu0 0.0
    %115 = vmatprep.subr.mxu0 0.0
    %116 = vmatpush1.msra.mxu0 0.0
    %117 = vmatprep.subr.mxu0 0.0
    %118 = vmatpush1.msra.mxu0 0.0
    %119 = vmatprep.subr.mxu0 0.0
    %120 = vmatpush1.msra.mxu0 0.0
    %121 = vmatprep.subr.mxu0 0.0
    %122 = vmatpush1.msra.mxu0 0.0
    %123 = vmatprep.subr.mxu0 0.0
    %124 = vmatpush1.msra.mxu0 0.0
    %125 = vmatprep.subr.mxu0 0.0
    %126 = vmatpush1.msra.mxu0 0.0
    %127 = vmatprep.mubr.f32.mxu0 0.0
    %128 = vmatmul.mubr.f32.gmra.mrb[0].mxu0 %v61
    %v129 = vpop.f32.mrb[0].mxu0
    %v130 = vadd.f32 0.0, %v129
    %v131 = vpop.f32.mrb[0].mxu0
    %132 = vdwg.mxu0
    %vm133 = vcmask 130048
    %v135 = vsel %vm133, %v42, 0
    %137 = vmatprep.subr.mxu0 0.0
    %138 = vmatpush1.msra.mxu0 %v53
    %139 = vmatprep.subr.mxu0 0.0
    %140 = vmatpush1.msra.mxu0 %v54
    %141 = vmatprep.subr.mxu0 0.0
    %142 = vmatpush1.msra.mxu0 0.0
    %143 = vmatprep.subr.mxu0 0.0
    %144 = vmatpush1.msra.mxu0 0.0
    %145 = vmatprep.subr.mxu0 0.0
    %146 = vmatpush1.msra.mxu0 0.0
    %147 = vmatprep.subr.mxu0 0.0
    %148 = vmatpush1.msra.mxu0 0.0
    %149 = vmatprep.subr.mxu0 0.0
    %150 = vmatpush1.msra.mxu0 0.0
    %151 = vmatprep.subr.mxu0 0.0
    %152 = vmatpush1.msra.mxu0 0.0
    %153 = vmatprep.subr.mxu0 0.0
    %154 = vmatpush1.msra.mxu0 0.0
    %155 = vmatprep.subr.mxu0 0.0
    %156 = vmatpush1.msra.mxu0 0.0
    %157 = vmatprep.subr.mxu0 0.0
    %158 = vmatpush1.msra.mxu0 0.0
    %159 = vmatprep.subr.mxu0 0.0
    %160 = vmatpush1.msra.mxu0 0.0
    %161 = vmatprep.subr.mxu0 0.0
    %162 = vmatpush1.msra.mxu0 0.0
    %163 = vmatprep.subr.mxu0 0.0
    %164 = vmatpush1.msra.mxu0 0.0
    %165 = vmatprep.subr.mxu0 0.0
    %166 = vmatpush1.msra.mxu0 0.0
    %167 = vmatprep.subr.mxu0 0.0
    %168 = vmatpush1.msra.mxu0 0.0
    %169 = vmatprep.subr.mxu0 0.0
    %170 = vmatpush1.msra.mxu0 0.0
    %171 = vmatprep.subr.mxu0 0.0
    %172 = vmatpush1.msra.mxu0 0.0
    %173 = vmatprep.subr.mxu0 0.0
    %174 = vmatpush1.msra.mxu0 0.0
    %175 = vmatprep.subr.mxu0 0.0
    %176 = vmatpush1.msra.mxu0 0.0
    %177 = vmatprep.subr.mxu0 0.0
    %178 = vmatpush1.msra.mxu0 0.0
    %179 = vmatprep.subr.mxu0 0.0
    %180 = vmatpush1.msra.mxu0 0.0
    %181 = vmatprep.subr.mxu0 0.0
    %182 = vmatpush1.msra.mxu0 0.0
    %183 = vmatprep.subr.mxu0 0.0
    %184 = vmatpush1.msra.mxu0 0.0
    %185 = vmatprep.subr.mxu0 0.0
    %186 = vmatpush1.msra.mxu0 0.0
    %187 = vmatprep.subr.mxu0 0.0
    %188 = vmatpush1.msra.mxu0 0.0
    %189 = vmatprep.subr.mxu0 0.0
    %190 = vmatpush1.msra.mxu0 0.0
    %191 = vmatprep.subr.mxu0 0.0
    %192 = vmatpush1.msra.mxu0 0.0
    %193 = vmatprep.subr.mxu0 0.0
    %194 = vmatpush1.msra.mxu0 0.0
    %195 = vmatprep.subr.mxu0 0.0
    %196 = vmatpush1.msra.mxu0 0.0
    %197 = vmatprep.subr.mxu0 0.0
    %198 = vmatpush1.msra.mxu0 0.0
    %199 = vmatprep.subr.mxu0 0.0
    %200 = vmatpush1.msra.mxu0 0.0
    %201 = vmatprep.mubr.f32.mxu0 0.0
    %202 = vmatmul.mubr.f32.gmra.mrb[0].mxu0 %v135
    %v203 = vpop.f32.mrb[0].mxu0
    %v204 = vadd.f32 %v130, %v203
    %v205 = vpop.f32.mrb[0].mxu0
    %206 = vdwg.mxu0
    %v207 = vld [vmem:[%s4] sm:$0x1]
    %v209 = vlaneseq
    %v210 = vshrl.u32 %v209, 7
    %v211 = vsub.s32 0, %v210
    %v212 = vrot.slane %v207, %v211
    %v214 = vadd.f32 %v204, %v212
    %v215 = vld [vmem:[%s5] sm:$0xff]
    %v216 = vld [vmem:[%s5 + $0x8] sm:$0xff]
    %v217 = vld [vmem:[%s6] sm:$0xff]
    %v218 = vld [vmem:[%s6 + $0x8] sm:$0xff]
    %v219 = vld [vmem:[%s6 + $0x10] sm:$0xff]
    %v220 = vld [vmem:[%s6 + $0x18] sm:$0xff]
    %221 = vmatprep.subr.mxu0 0.0
    %222 = vmatpush1.msra.mxu0 %v217
    %223 = vmatprep.subr.mxu0 0.0
    %224 = vmatpush1.msra.mxu0 %v218
    %225 = vmatprep.subr.mxu0 0.0
    %226 = vmatpush1.msra.mxu0 %v219
    %227 = vmatprep.subr.mxu0 0.0
    %228 = vmatpush1.msra.mxu0 %v220
    %229 = vmatprep.subr.mxu0 0.0
    %230 = vmatpush1.msra.mxu0 0.0
    %231 = vmatprep.subr.mxu0 0.0
    %232 = vmatpush1.msra.mxu0 0.0
    %233 = vmatprep.subr.mxu0 0.0
    %234 = vmatpush1.msra.mxu0 0.0
    %235 = vmatprep.subr.mxu0 0.0
    %236 = vmatpush1.msra.mxu0 0.0
    %237 = vmatprep.subr.mxu0 0.0
    %238 = vmatpush1.msra.mxu0 0.0
    %239 = vmatprep.subr.mxu0 0.0
    %240 = vmatpush1.msra.mxu0 0.0
    %241 = vmatprep.subr.mxu0 0.0
    %242 = vmatpush1.msra.mxu0 0.0
    %243 = vmatprep.subr.mxu0 0.0
    %244 = vmatpush1.msra.mxu0 0.0
    %245 = vmatprep.subr.mxu0 0.0
    %246 = vmatpush1.msra.mxu0 0.0
    %247 = vmatprep.subr.mxu0 0.0
    %248 = vmatpush1.msra.mxu0 0.0
    %249 = vmatprep.subr.mxu0 0.0
    %250 = vmatpush1.msra.mxu0 0.0
    %251 = vmatprep.subr.mxu0 0.0
    %252 = vmatpush1.msra.mxu0 0.0
    %253 = vmatprep.subr.mxu0 0.0
    %254 = vmatpush1.msra.mxu0 0.0
    %255 = vmatprep.subr.mxu0 0.0
    %256 = vmatpush1.msra.mxu0 0.0
    %257 = vmatprep.subr.mxu0 0.0
    %258 = vmatpush1.msra.mxu0 0.0
    %259 = vmatprep.subr.mxu0 0.0
    %260 = vmatpush1.msra.mxu0 0.0
    %261 = vmatprep.subr.mxu0 0.0
    %262 = vmatpush1.msra.mxu0 0.0
    %263 = vmatprep.subr.mxu0 0.0
    %264 = vmatpush1.msra.mxu0 0.0
    %265 = vmatprep.subr.mxu0 0.0
    %266 = vmatpush1.msra.mxu0 0.0
    %267 = vmatprep.subr.mxu0 0.0
    %268 = vmatpush1.msra.mxu0 0.0
    %269 = vmatprep.subr.mxu0 0.0
    %270 = vmatpush1.msra.mxu0 0.0
    %271 = vmatprep.subr.mxu0 0.0
    %272 = vmatpush1.msra.mxu0 0.0
    %273 = vmatprep.subr.mxu0 0.0
    %274 = vmatpush1.msra.mxu0 0.0
    %275 = vmatprep.subr.mxu0 0.0
    %276 = vmatpush1.msra.mxu0 0.0
    %277 = vmatprep.subr.mxu0 0.0
    %278 = vmatpush1.msra.mxu0 0.0
    %279 = vmatprep.subr.mxu0 0.0
    %280 = vmatpush1.msra.mxu0 0.0
    %281 = vmatprep.subr.mxu0 0.0
    %282 = vmatpush1.msra.mxu0 0.0
    %283 = vmatprep.subr.mxu0 0.0
    %284 = vmatpush1.msra.mxu0 0.0
    %285 = vmatprep.mubr.f32.mxu0 0.0
    %286 = vmatmul.mubr.f32.gmra.mrb[0].mxu0 %v61
    %v287 = vpop.f32.mrb[0].mxu0
    %v288 = vadd.f32 0.0, %v287
    %v289 = vpop.f32.mrb[0].mxu0
    %290 = vdwg.mxu0
    %291 = vmatprep.subr.mxu0 0.0
    %292 = vmatpush1.msra.mxu0 %v215
    %293 = vmatprep.subr.mxu0 0.0
    %294 = vmatpush1.msra.mxu0 %v216
    %295 = vmatprep.subr.mxu0 0.0
    %296 = vmatpush1.msra.mxu0 0.0
    %297 = vmatprep.subr.mxu0 0.0
    %298 = vmatpush1.msra.mxu0 0.0
    %299 = vmatprep.subr.mxu0 0.0
    %300 = vmatpush1.msra.mxu0 0.0
    %301 = vmatprep.subr.mxu0 0.0
    %302 = vmatpush1.msra.mxu0 0.0
    %303 = vmatprep.subr.mxu0 0.0
    %304 = vmatpush1.msra.mxu0 0.0
    %305 = vmatprep.subr.mxu0 0.0
    %306 = vmatpush1.msra.mxu0 0.0
    %307 = vmatprep.subr.mxu0 0.0
    %308 = vmatpush1.msra.mxu0 0.0
    %309 = vmatprep.subr.mxu0 0.0
    %310 = vmatpush1.msra.mxu0 0.0
    %311 = vmatprep.subr.mxu0 0.0
    %312 = vmatpush1.msra.mxu0 0.0
    %313 = vmatprep.subr.mxu0 0.0
    %314 = vmatpush1.msra.mxu0 0.0
    %315 = vmatprep.subr.mxu0 0.0
    %316 = vmatpush1.msra.mxu0 0.0
    %317 = vmatprep.subr.mxu0 0.0
    %318 = vmatpush1.msra.mxu0 0.0
    %319 = vmatprep.subr.mxu0 0.0
    %320 = vmatpush1.msra.mxu0 0.0
    %321 = vmatprep.subr.mxu0 0.0
    %322 = vmatpush1.msra.mxu0 0.0
    %323 = vmatprep.subr.mxu0 0.0
    %324 = vmatpush1.msra.mxu0 0.0
    %325 = vmatprep.subr.mxu0 0.0
    %326 = vmatpush1.msra.mxu0 0.0
    %327 = vmatprep.subr.mxu0 0.0
    %328 = vmatpush1.msra.mxu0 0.0
    %329 = vmatprep.subr.mxu0 0.0
    %330 = vmatpush1.msra.mxu0 0.0
    %331 = vmatprep.subr.mxu0 0.0
    %332 = vmatpush1.msra.mxu0 0.0
    %333 = vmatprep.subr.mxu0 0.0
    %334 = vmatpush1.msra.mxu0 0.0
    %335 = vmatprep.subr.mxu0 0.0
    %336 = vmatpush1.msra.mxu0 0.0
    %337 = vmatprep.subr.mxu0 0.0
    %338 = vmatpush1.msra.mxu0 0.0
    %339 = vmatprep.subr.mxu0 0.0
    %340 = vmatpush1.msra.mxu0 0.0
    %341 = vmatprep.subr.mxu0 0.0
    %342 = vmatpush1.msra.mxu0 0.0
    %343 = vmatprep.subr.mxu0 0.0
    %344 = vmatpush1.msra.mxu0 0.0
    %345 = vmatprep.subr.mxu0 0.0
    %346 = vmatpush1.msra.mxu0 0.0
    %347 = vmatprep.subr.mxu0 0.0
    %348 = vmatpush1.msra.mxu0 0.0
    %349 = vmatprep.subr.mxu0 0.0
    %350 = vmatpush1.msra.mxu0 0.0
    %351 = vmatprep.subr.mxu0 0.0
    %352 = vmatpush1.msra.mxu0 0.0
    %353 = vmatprep.subr.mxu0 0.0
    %354 = vmatpush1.msra.mxu0 0.0
    %355 = vmatprep.mubr.f32.mxu0 0.0
    %356 = vmatmul.mubr.f32.gmra.mrb[0].mxu0 %v135
    %v357 = vpop.f32.mrb[0].mxu0
    %v358 = vadd.f32 %v288, %v357
    %v359 = vpop.f32.mrb[0].mxu0
    %360 = vdwg.mxu0
    %v361 = vld [vmem:[%s7] sm:$0x1]
    %v363 = vlaneseq
    %v364 = vshrl.u32 %v363, 7
    %v365 = vsub.s32 0, %v364
    %v366 = vrot.slane %v361, %v365
    %v368 = vadd.f32 %v358, %v366
    %369 = vst.msk [vmem:[#allocation2] sm:$0xff] %vm59, %v214
    %vm370 = vcmask 64512
    %371 = vst.msk [vmem:[#allocation4] sm:$0xff] %vm370, %v368
    // Predicated region
    $region34: #{tpu_custom_call.1} parent=1 // pred_check
      _
    $region35: #{tpu_custom_call.1} parent=1 // pred_check_branch
      %373 = sbr.rel (0) target = $region37
    $region36: #{tpu_custom_call.1} parent=1 // pred_region
      %s375 = ssub.s32 128, 128
      %376 = vsyncadd [#allocation3], %s375
      %s378 = sshll.u32 [#allocation2], 4
      %s379 = int_to_ptr.vmem [resolvable:$true] %s378
      %381 = dma.vmem_to_hbm [thread:$0]  %s379, 128, %s8, [#allocation3]
    $region37: #{tpu_custom_call.1} parent=1 // pred_fallthru
      _
    // Predicated region
    $region38: #{tpu_custom_call.1} parent=1 // pred_check
      _
    $region39: #{tpu_custom_call.1} parent=1 // pred_check_branch
      %383 = sbr.rel (0) target = $region41
    $region40: #{tpu_custom_call.1} parent=1 // pred_region
      %s385 = ssub.s32 128, 128
      %386 = vsyncadd [#allocation5], %s385
      %s388 = sshll.u32 [#allocation4], 4
      %s389 = int_to_ptr.vmem [resolvable:$true] %s388
      %391 = dma.vmem_to_hbm [thread:$0]  %s389, 128, %s9, [#allocation5]
    $region41: #{tpu_custom_call.1} parent=1 // pred_fallthru
      _
    // Predicated region
    $region42: #{tpu_custom_call.1} parent=1 // pred_check
      _
    $region43: #{tpu_custom_call.1} parent=1 // pred_check_branch
      %393 = sbr.rel (0) target = $region45
    $region44: #{tpu_custom_call.1} parent=1 // pred_region
      %394 = dma.done [#allocation3], 128
    $region45: #{tpu_custom_call.1} parent=1 // pred_fallthru
      _
    // Predicated region
    $region46: #{tpu_custom_call.1} parent=1 // pred_check
      _
    $region47: #{tpu_custom_call.1} parent=1 // pred_check_branch
      %396 = sbr.rel (0) target = $region49
    $region48: #{tpu_custom_call.1} parent=1 // pred_region
      %397 = dma.done [#allocation5], 128
    $region49: #{tpu_custom_call.1} parent=1 // pred_fallthru
      _
    %398 = vsyncpa [#allocation3], 1
    %399 = vsyncpa [#allocation5], 1

</llo_original>
